<compile_context>
chip_gen: v6e
topology: v6e:2x2x1
jax: 0.10.0
libtpu: 0.0.40
codegen_flags: <defaults>
</compile_context>

<pallas_src>
import functools

import jax
import jax.numpy as jnp
from jax.experimental import pallas as pl
from jax.experimental.pallas import tpu as pltpu

EPS = 1e-5
_VMEM_LIMIT = 32 * 1024 * 1024


def _compiler_params(n_grid_axes):
    return pltpu.CompilerParams(
        dimension_semantics=("parallel",) * n_grid_axes,
        vmem_limit_bytes=_VMEM_LIMIT)


def _pick_tile(m, cap):
    """Largest multiple-of-8 divisor of m that is <= cap (else the full extent)."""
    cap = min(m, cap)
    for t in range(cap - cap % 8, 0, -8):
        if m % t == 0:
            return t
    return m


# ---------------------------------------------------------------------------
# Kernels
# ---------------------------------------------------------------------------

def _stats_kernel(x_ref, st_ref):
    """Per-channel partial sum / sum-of-squares of one (TM, C) row block."""
    x = x_ref[...].astype(jnp.float32)
    s = jnp.sum(x, axis=0, keepdims=True)
    sq = jnp.sum(x * x, axis=0, keepdims=True)
    st_ref[...] = jnp.concatenate([s, sq], axis=0).reshape(st_ref.shape)


def _bn_relu_conv1_kernel(x_ref, a1_ref, b1_ref, w1_ref, t1_ref, st_ref):
    """t1 = relu(bn1(x)) @ w1 for one row block; also emits bn2 partial stats."""
    x = x_ref[...].astype(jnp.float32)
    act = jnp.maximum(x * a1_ref[...] + b1_ref[...], 0.0)
    t1 = jnp.dot(act, w1_ref[...], preferred_element_type=jnp.float32)
    t1_ref[...] = t1.astype(t1_ref.dtype)
    s = jnp.sum(t1, axis=0, keepdims=True)
    sq = jnp.sum(t1 * t1, axis=0, keepdims=True)
    st_ref[...] = jnp.concatenate([s, sq], axis=0).reshape(st_ref.shape)


def _bn_relu_conv3x3_kernel(t1_ref, a2_ref, b2_ref, w2_ref, t2_ref, st_ref,
                            pad_ref, *, stride):
    """act2 = relu(bn2(t1)); t2 = conv3x3(act2, stride, pad=1) as one im2col dot.

    stride == 1 : t1_ref (H, W, C),       pad_ref (H+2, W+2, C)
    stride  > 1 : t1_ref (H, Wo, s, C),   pad_ref (H+2, Wo+1, s, C)
        The W axis is phase-split into (Wo, s) by a free XLA reshape in the wrapper,
        and the left zero-padding is widened from 1 to s columns (scratch column
        coordinate q holds padded columns s*q..s*q+s-1), so both the padding and the
        strided patch gather reduce to static slices in-kernel.  The H stride is a
        leading-dim split reshape.  One image per grid step; also emits bn3 stats.
    """
    s = stride
    Ho, Wo, Cp = t2_ref.shape
    K = w2_ref.shape[0]          # = 9 * planes
    H = t1_ref.shape[0]

    act = jnp.maximum(
        t1_ref[...].astype(jnp.float32) * a2_ref[...] + b2_ref[...], 0.0)

    # Zero-padding fused into the kernel: the scratch border stays zero, only the
    # interior is overwritten with the freshly computed activation.
    pad_ref[...] = jnp.zeros_like(pad_ref)

    taps = []
    if s == 1:
        W = t1_ref.shape[1]
        pad_ref[1:H + 1, 1:W + 1, :] = act
        padded = pad_ref[...]                               # (H+2, W+2, C)
        for dy in range(3):
            for dx in range(3):
                taps.append(padded[dy:dy + H, dx:dx + W, :])            # (Ho, Wo, C)
    else:
        pad_ref[1:H + 1, 1:Wo + 1, :, :] = act
        padded = pad_ref[...]                               # (H+2, Wo+1, s, C)
        for dy in range(3):
            rows = padded[dy:dy + H]                        # (H, Wo+1, s, C)
            rows = rows.reshape(Ho, s, Wo + 1, s, rows.shape[-1])[:, 0]  # H stride
            for dx in range(3):
                off = dx + s - 1                            # column offset in q/r coords
                q0, r = off // s, off % s
                taps.append(rows[:, q0:q0 + Wo, r:r + 1, :])            # (Ho, Wo, 1, C)

    # Single big-K MXU dot instead of 9 tiny-K matmuls.
    patches = jnp.concatenate(taps, axis=-1).reshape(Ho * Wo, K)
    t2 = jnp.dot(patches, w2_ref[...], preferred_element_type=jnp.float32)
    t2_ref[...] = t2.reshape(Ho, Wo, Cp).astype(t2_ref.dtype)
    ssum = jnp.sum(t2, axis=0, keepdims=True)
    ssq = jnp.sum(t2 * t2, axis=0, keepdims=True)
    st_ref[...] = jnp.concatenate([ssum, ssq], axis=0).reshape(st_ref.shape)


def _bn_relu_conv3_proj_kernel(t2_ref, a3_ref, b3_ref, w3_ref,
                               xs_ref, a1_ref, b1_ref, wsc_ref, o_ref):
    """o = relu(bn3(t2)) @ w3 + relu(bn1(x_strided)) @ wsc  (projection shortcut)."""
    act3 = jnp.maximum(
        t2_ref[...].astype(jnp.float32) * a3_ref[...] + b3_ref[...], 0.0)
    y = jnp.dot(act3, w3_ref[...], preferred_element_type=jnp.float32)
    act1 = jnp.maximum(
        xs_ref[...].astype(jnp.float32) * a1_ref[...] + b1_ref[...], 0.0)
    sc = jnp.dot(act1, wsc_ref[...], preferred_element_type=jnp.float32)
    o_ref[...] = (y + sc).astype(o_ref.dtype)


def _bn_relu_conv3_id_kernel(t2_ref, a3_ref, b3_ref, w3_ref, x_ref, o_ref):
    """o = relu(bn3(t2)) @ w3 + x  (identity shortcut)."""
    act3 = jnp.maximum(
        t2_ref[...].astype(jnp.float32) * a3_ref[...] + b3_ref[...], 0.0)
    y = jnp.dot(act3, w3_ref[...], preferred_element_type=jnp.float32)
    o_ref[...] = (y + x_ref[...].astype(jnp.float32)).astype(o_ref.dtype)


# ---------------------------------------------------------------------------
# Wrapper
# ---------------------------------------------------------------------------

def _fold_bn(partial_stats, count, gamma, beta):
    """Fold batch stats (sum / sum-of-squares partials) + affine into scale/shift."""
    tot = jnp.sum(partial_stats, axis=0)            # (2, C)
    mean = tot[0] / count
    var = tot[1] / count - mean * mean              # biased variance (training mode)
    inv = jax.lax.rsqrt(var + EPS)
    a = (gamma * inv).astype(jnp.float32)
    b = (beta - mean * gamma * inv).astype(jnp.float32)
    return a[None, :], b[None, :]


def preact_bottleneck_forward(x_nchw, params, stride, *, row_tile=256):
    N, Cin, H, W = x_nchw.shape
    planes = params["w1"].shape[1]
    Cout = params["w3"].shape[1]
    s = int(stride)
    Ho = (H + 2 - 3) // s + 1
    Wo = (W + 2 - 3) // s + 1
    M, Mo = N * H * W, N * Ho * Wo
    has_proj = (s != 1) or (Cin != Cout)
    if s > 1 and (H % s or W % s):
        raise ValueError("spatial dims must be divisible by the stride")

    # NCHW -> NHWC once at the module boundary (an NHWC model would skip this).
    x_nhwc = jnp.transpose(x_nchw, (0, 2, 3, 1))
    x_flat = x_nhwc.reshape(M, Cin)

    TM = _pick_tile(M, row_tile)
    nblk = M // TM

    # ---- pass 1: bn1 batch statistics (tiled partial sums) --------------------
    st1 = pl.pallas_call(
        _stats_kernel,
        grid=(nblk,),
        in_specs=[pl.BlockSpec((TM, Cin), lambda i: (i, 0))],
        out_specs=pl.BlockSpec((1, 2, Cin), lambda i: (i, 0, 0)),
        out_shape=jax.ShapeDtypeStruct((nblk, 2, Cin), jnp.float32),
        compiler_params=_compiler_params(1),
    )(x_flat)
    a1, b1 = _fold_bn(st1, M, params["g1"], params["b1"])

    # ---- pass 2: fused relu(bn1(x)) @ w1 + bn2 partial stats -------------------
    t1_flat, st2 = pl.pallas_call(
        _bn_relu_conv1_kernel,
        grid=(nblk,),
        in_specs=[pl.BlockSpec((TM, Cin), lambda i: (i, 0)),
                  pl.BlockSpec((1, Cin), lambda i: (0, 0)),
                  pl.BlockSpec((1, Cin), lambda i: (0, 0)),
                  pl.BlockSpec((Cin, planes), lambda i: (0, 0))],
        out_specs=[pl.BlockSpec((TM, planes), lambda i: (i, 0)),
                   pl.BlockSpec((1, 2, planes), lambda i: (i, 0, 0))],
        out_shape=[jax.ShapeDtypeStruct((M, planes), jnp.float32),
                   jax.ShapeDtypeStruct((nblk, 2, planes), jnp.float32)],
        compiler_params=_compiler_params(1),
    )(x_flat, a1, b1, params["w1"])
    a2, b2 = _fold_bn(st2, M, params["g2"], params["b2"])

    # ---- pass 3: fused relu(bn2) -> pad -> strided 3x3 conv + bn3 stats --------
    if s == 1:
        t1_in = t1_flat.reshape(N * H, W, planes)
        t1_spec = pl.BlockSpec((H, W, planes), lambda n: (n, 0, 0))
        pad_scratch = pltpu.VMEM((H + 2, W + 2, planes), jnp.float32)
    else:
        # Free metadata reshape: split W into (Wo, s) phases.
        t1_in = t1_flat.reshape(N * H, Wo, s, planes)
        t1_spec = pl.BlockSpec((H, Wo, s, planes), lambda n: (n, 0, 0, 0))
        pad_scratch = pltpu.VMEM((H + 2, Wo + 1, s, planes), jnp.float32)

    w2f = params["w2"].reshape(9 * planes, planes)
    t2_out, st3 = pl.pallas_call(
        functools.partial(_bn_relu_conv3x3_kernel, stride=s),
        grid=(N,),
        in_specs=[t1_spec,
                  pl.BlockSpec((1, planes), lambda n: (0, 0)),
                  pl.BlockSpec((1, planes), lambda n: (0, 0)),
                  pl.BlockSpec((9 * planes, planes), lambda n: (0, 0))],
        out_specs=[pl.BlockSpec((Ho, Wo, planes), lambda n: (n, 0, 0)),
                   pl.BlockSpec((1, 2, planes), lambda n: (n, 0, 0))],
        out_shape=[jax.ShapeDtypeStruct((N * Ho, Wo, planes), jnp.float32),
                   jax.ShapeDtypeStruct((N, 2, planes), jnp.float32)],
        scratch_shapes=[pad_scratch],
        compiler_params=_compiler_params(1),
    )(t1_in, a2, b2, w2f)
    a3, b3 = _fold_bn(st3, Mo, params["g3"], params["b3"])

    # ---- pass 4: fused relu(bn3) @ w3 + shortcut + residual add ----------------
    t2_flat = t2_out.reshape(Mo, planes)
    TMo = _pick_tile(Mo, row_tile)
    nblk_o = Mo // TMo
    base_specs = [pl.BlockSpec((TMo, planes), lambda i: (i, 0)),
                  pl.BlockSpec((1, planes), lambda i: (0, 0)),
                  pl.BlockSpec((1, planes), lambda i: (0, 0)),
                  pl.BlockSpec((planes, Cout), lambda i: (0, 0))]
    if has_proj:
        # Projection shortcut computed inside the final kernel: re-read the strided
        # input and recompute relu(bn1(.)) (cheaper than an act1 HBM round trip).
        xs_flat = x_nhwc[:, ::s, ::s, :].reshape(Mo, Cin)
        out_flat = pl.pallas_call(
            _bn_relu_conv3_proj_kernel,
            grid=(nblk_o,),
            in_specs=base_specs + [
                pl.BlockSpec((TMo, Cin), lambda i: (i, 0)),
                pl.BlockSpec((1, Cin), lambda i: (0, 0)),
                pl.BlockSpec((1, Cin), lambda i: (0, 0)),
                pl.BlockSpec((Cin, Cout), lambda i: (0, 0))],
            out_specs=pl.BlockSpec((TMo, Cout), lambda i: (i, 0)),
            out_shape=jax.ShapeDtypeStruct((Mo, Cout), jnp.float32),
            compiler_params=_compiler_params(1),
        )(t2_flat, a3, b3, params["w3"], xs_flat, a1, b1, params["wsc"])
    else:
        out_flat = pl.pallas_call(
            _bn_relu_conv3_id_kernel,
            grid=(nblk_o,),
            in_specs=base_specs + [pl.BlockSpec((TMo, Cout), lambda i: (i, 0))],
            out_specs=pl.BlockSpec((TMo, Cout), lambda i: (i, 0)),
            out_shape=jax.ShapeDtypeStruct((Mo, Cout), jnp.float32),
            compiler_params=_compiler_params(1),
        )(t2_flat, a3, b3, params["w3"], x_flat)

    out = out_flat.reshape(N, Ho, Wo, Cout)
    return jnp.transpose(out, (0, 3, 1, 2))               # NHWC -> NCHW at the boundary


# ---------------------------------------------------------------------------
# Pure-JAX reference (verification only)
# ---------------------------------------------------------------------------

def _ref_forward(x_nchw, params, stride):
    x = jnp.transpose(x_nchw, (0, 2, 3, 1))
    dn = ("NHWC", "HWIO", "NHWC")

    def bn_relu(t, g, b):
        mean = t.mean(axis=(0, 1, 2), keepdims=True)
        var = ((t - mean) ** 2).mean(axis=(0, 1, 2), keepdims=True)
        return jnp.maximum((t - mean) * jax.lax.rsqrt(var + EPS) * g + b, 0.0)

    Cin = x.shape[-1]
    Cout = params["w3"].shape[1]
    act1 = bn_relu(x, params["g1"], params["b1"])
    if stride != 1 or Cin != Cout:
        sc = jax.lax.conv_general_dilated(
            act1, params["wsc"][None, None], (stride, stride), "VALID",
            dimension_numbers=dn)
    else:
        sc = x
    t1 = jax.lax.conv_general_dilated(
        act1, params["w1"][None, None], (1, 1), "VALID", dimension_numbers=dn)
    t2 = jax.lax.conv_general_dilated(
        bn_relu(t1, params["g2"], params["b2"]), params["w2"],
        (stride, stride), ((1, 1), (1, 1)), dimension_numbers=dn)
    t3 = jax.lax.conv_general_dilated(
        bn_relu(t2, params["g3"], params["b3"]), params["w3"][None, None],
        (1, 1), "VALID", dimension_numbers=dn)
    return jnp.transpose(t3 + sc, (0, 3, 1, 2))


# ---------------------------------------------------------------------------
# Main
# ---------------------------------------------------------------------------

def _make_params(key, in_planes, planes, stride, expansion=4):
    Cout = expansion * planes
    ks = jax.random.split(key, 10)
    p = {
        "g1": 1.0 + 0.1 * jax.random.normal(ks[0], (in_planes,), jnp.float32),
        "b1": 0.1 * jax.random.normal(ks[1], (in_planes,), jnp.float32),
        "w1": 0.1 * jax.random.normal(ks[2], (in_planes, planes), jnp.float32),
        "g2": 1.0 + 0.1 * jax.random.normal(ks[3], (planes,), jnp.float32),
        "b2": 0.1 * jax.random.normal(ks[4], (planes,), jnp.float32),
        "w2": 0.1 * jax.random.normal(ks[5], (3, 3, planes, planes), jnp.float32),
        "g3": 1.0 + 0.1 * jax.random.normal(ks[6], (planes,), jnp.float32),
        "b3": 0.1 * jax.random.normal(ks[7], (planes,), jnp.float32),
        "w3": 0.1 * jax.random.normal(ks[8], (planes, Cout), jnp.float32),
    }
    if stride != 1 or in_planes != Cout:
        p["wsc"] = 0.1 * jax.random.normal(ks[9], (in_planes, Cout), jnp.float32)
    return p


if __name__ == "__main__":
    key = jax.random.PRNGKey(0)
    kx1, kp1, kx2, kp2 = jax.random.split(key, 4)

    # Case 1: projection shortcut -- PreActBottleneck(in_planes=8, planes=4, stride=2).
    N, in_planes, planes, stride, H = 2, 8, 4, 2, 16
    x1 = jax.random.normal(kx1, (N, in_planes, H, H), jnp.float32)
    p1 = _make_params(kp1, in_planes, planes, stride)
    out1 = jax.block_until_ready(preact_bottleneck_forward(x1, p1, stride))
    ref1 = _ref_forward(x1, p1, stride)
    assert out1.shape == ref1.shape, (out1.shape, ref1.shape)
    if not jnp.allclose(out1, ref1, atol=2e-3, rtol=2e-3):
        raise AssertionError(
            "projection-shortcut case mismatch, max abs err "
            f"{float(jnp.max(jnp.abs(out1 - ref1)))}")

    # Case 2: identity shortcut -- PreActBottleneck(in_planes=16, planes=4, stride=1).
    N, in_planes, planes, stride, H = 2, 16, 4, 1, 8
    x2 = jax.random.normal(kx2, (N, in_planes, H, H), jnp.float32)
    p2 = _make_params(kp2, in_planes, planes, stride)
    out2 = jax.block_until_ready(preact_bottleneck_forward(x2, p2, stride))
    ref2 = _ref_forward(x2, p2, stride)
    assert out2.shape == ref2.shape, (out2.shape, ref2.shape)
    if not jnp.allclose(out2, ref2, atol=2e-3, rtol=2e-3):
        raise AssertionError(
            "identity-shortcut case mismatch, max abs err "
            f"{float(jnp.max(jnp.abs(out2 - ref2)))}")

    print("KERNEL_OK")
</pallas_src>

<mosaic_0001>
module attributes {stable_mosaic.version = 11 : i64} {
  func.func @_stats_kernel(%arg0: i32, %arg1: memref<256x8xf32, #tpu.memory_space<vmem>>, %arg2: memref<1x2x8xf32, #tpu.memory_space<vmem>>) attributes {dimension_semantics = [#tpu.dimension_semantics<parallel>], iteration_bounds = array<i64: 2>, scalar_prefetch = 0 : i64, scratch_operands = 0 : i64, tpu.core_type = #tpu.core_type<tc>, window_params = [{transform_indices = @transform_0, window_bounds = array<i64: 256, 8>}, {transform_indices = @transform_1, window_bounds = array<i64: 1, 2, 8>}]} {
    %c0 = arith.constant 0 : index
    %c0_0 = arith.constant 0 : index
    %0 = vector.load %arg1[%c0, %c0_0] : memref<256x8xf32, #tpu.memory_space<vmem>>, vector<256x8xf32>
    %cst = arith.constant dense<0.000000e+00> : vector<8xf32>
    %1 = vector.multi_reduction <add>, %0, %cst [0] : vector<256x8xf32> to vector<8xf32>
    %2 = vector.shape_cast %1 : vector<8xf32> to vector<1x8xf32>
    %3 = arith.mulf %0, %0 : vector<256x8xf32>
    %cst_1 = arith.constant dense<0.000000e+00> : vector<8xf32>
    %4 = vector.multi_reduction <add>, %3, %cst_1 [0] : vector<256x8xf32> to vector<8xf32>
    %5 = vector.shape_cast %4 : vector<8xf32> to vector<1x8xf32>
    %6 = tpu.concatenate %2, %5 in 0 : vector<1x8xf32>, vector<1x8xf32> -> vector<2x8xf32>
    %7 = vector.shape_cast %6 : vector<2x8xf32> to vector<1x2x8xf32>
    %c0_2 = arith.constant 0 : index
    %c0_3 = arith.constant 0 : index
    %c0_4 = arith.constant 0 : index
    %8 = vector.load %arg2[%c0_2, %c0_3, %c0_4] : memref<1x2x8xf32, #tpu.memory_space<vmem>>, vector<1x2x8xf32>
    tpu.vector_store %arg2[%c0_2, %c0_3, %c0_4], %7 {strides = array<i32>} : memref<1x2x8xf32, #tpu.memory_space<vmem>>, vector<1x2x8xf32>,
    return
  }
  func.func @transform_0(%arg0: i32) -> (i32, i32) {
    %c0_i32 = arith.constant 0 : i32
    %c0_i32_0 = arith.constant 0 : i32
    return %arg0, %c0_i32 : i32, i32
  }
  func.func @transform_1(%arg0: i32) -> (i32, i32, i32) {
    %c0_i32 = arith.constant 0 : i32
    %c0_i32_0 = arith.constant 0 : i32
    %c0_i32_1 = arith.constant 0 : i32
    return %arg0, %c0_i32, %c0_i32_0 : i32, i32, i32
  }
}

</mosaic_0001>

<llo_original>
// kernel: tpu_custom_call.1
$region0: #{tpu_custom_call.1}
  #allocation0 [shape = 'u32[]', space=smem, size = 0x4, offset = 0x4, fixed_abs, tag = 'smem constant byte address 0x4 - core index']
  #allocation1 [shape = 'u32[144,128]{1,0:T(1,128)}', space=vmem, size = 0x12000, scoped, tag = 'internal scratch']
  %s0 = inlined_call_operand.vmem [shape: f32[512,8], index: 0, kind: input, shape index: {}]
  %s1 = inlined_call_operand.hbm [shape: f32[2,2,8], index: 1, kind: output, shape index: {}]
  %s2 = sld [smem:[#allocation0]]
  $region37: #{tpu_custom_call.1} parent=0
    _
  %s4 = ssub.s32 1, %s2
  %s5 = scalar_select 0, %s4, %s2
  $region1: #{tpu_custom_call.1} parent=0
    #allocation2 [shape = 'u8[2048]{0}', space=vmem, size = 0x800, scoped, tag = 'output window, operand 0']
    #allocation3 [shape = 's32[2]{0}', space=sflag, size = 0x8, scoped, tag = 'scoped memory for tpu_custom_call.1']
    %6 = vsyncpa [#allocation3], 0
    %s7 = scalar_lea.sflag [#allocation3], 1
    %8 = vsyncpa %s7, 0
    loop: start=0, step=1, limit=4
    $region2: #{tpu_custom_call.1} parent=1 // loop_pre_header
      _
    $region3: #{tpu_custom_call.1} parent=1 // loop_header
      %s10 = sphi 0, %s14
      %p11 = scmp.ge.s32.totalorder %s10, 4
      %s20 = sphi 0, %s22
      %s23 = sphi 0, %s20
      %s24 = sphi 0, %s23
      %s40 = sphi 0, %s24
      %s46 = sphi 0, %s48
      %s49 = sphi 0, %s46
      %s50 = sphi 0, %s49
      %s66 = sphi 0, %s50
    $region4: #{tpu_custom_call.1} parent=1 // loop_header_branch
      %13 = sbr.rel (%p11) target = $region8
    $region5: #{tpu_custom_call.1} parent=1 // loop_body
      %s15 = ssub.s32 %s10, 1
      %s16 = ssub.s32 %s10, 2
      %s17 = sadd.s32 %s10, 1
      %s18 = ssub.s32 %s10, %s17
      %p19 = scmp.eq.s32.totalorder %s18, 0
      %s21 = sadd.s32 %s20, 1
      %s22 = scalar_select %p19, %s20, %s21
      %p25 = pneg %p19
      %p26 = scmp.eq.s32.totalorder %s10, 1
      %p27 = por %p25, %p26
      %p28 = scmp.ne.s32.totalorder %s20, %s23
      %p29 = scmp.eq.s32.totalorder %s10, 0
      %p30 = por %p28, %p29
      %p31 = scmp.ne.s32.totalorder %s20, %s23
      %p32 = scmp.eq.s32.totalorder %s15, 1
      %p33 = por %p31, %p32
      %p34 = scmp.ne.s32.totalorder %s23, %s24
      %p35 = scmp.eq.s32.totalorder %s15, 0
      %p36 = por %p34, %p35
      %p37 = scmp.ne.s32.totalorder %s23, %s24
      %p38 = scmp.eq.s32.totalorder %s16, 1
      %p39 = por %p37, %p38
      %p41 = scmp.ne.s32.totalorder %s24, %s40
      %p42 = scmp.eq.s32.totalorder %s16, 0
      %p43 = por %p41, %p42
      %s44 = ssub.s32 %s10, %s17
      %p45 = scmp.eq.s32.totalorder %s44, 0
      %s47 = sadd.s32 %s46, 1
      %s48 = scalar_select %p45, %s46, %s47
      %p51 = pneg %p45
      %p52 = scmp.eq.s32.totalorder %s10, 1
      %p53 = por %p51, %p52
      %p54 = scmp.ne.s32.totalorder %s46, %s49
      %p55 = scmp.eq.s32.totalorder %s10, 0
      %p56 = por %p54, %p55
      %p57 = scmp.ne.s32.totalorder %s46, %s49
      %p58 = scmp.eq.s32.totalorder %s15, 1
      %p59 = por %p57, %p58
      %p60 = scmp.ne.s32.totalorder %s49, %s50
      %p61 = scmp.eq.s32.totalorder %s15, 0
      %p62 = por %p60, %p61
      %p63 = scmp.ne.s32.totalorder %s49, %s50
      %p64 = scmp.eq.s32.totalorder %s16, 1
      %p65 = por %p63, %p64
      %p67 = scmp.ne.s32.totalorder %s50, %s66
      %p68 = scmp.eq.s32.totalorder %s16, 0
      %p69 = por %p67, %p68
      %p70 = scmp.le.s32.totalorder 1, %s10
      %p71 = scmp.lt.s32.totalorder %s10, 3
      %p72 = pnand %p70, %p71
      %p73 = pneg %p72
      // Predicated region
      $region9: #{tpu_custom_call.1} parent=5 // pred_check
        _
      $region10: #{tpu_custom_call.1} parent=5 // pred_check_branch
        %75 = sbr.rel (%p72) target = $region12
      $region11: #{tpu_custom_call.1} parent=5 // pred_region
        %s76 = ssub.s32 %s10, 1
      $region12: #{tpu_custom_call.1} parent=5 // pred_fallthru
        _
      %p77 = scmp.lt.s32.totalorder %s10, 2
      // Predicated region
      $region13: #{tpu_custom_call.1} parent=5 // pred_check
        %p78 = pneg %p77
      $region14: #{tpu_custom_call.1} parent=5 // pred_check_branch
        %80 = sbr.rel (%p78) target = $region16
      $region15: #{tpu_custom_call.1} parent=5 // pred_region
        // Predicated region
        $region17: #{tpu_custom_call.1} parent=15 // pred_check
          %p81 = pneg %p30
        $region18: #{tpu_custom_call.1} parent=15 // pred_check_branch
          %83 = sbr.rel (%p81) target = $region20
        $region19: #{tpu_custom_call.1} parent=15 // pred_region
          %s84 = smul.u32 32, %s10
          %p85 = scmp.lt.s32.totalorder %s84, 63
          %s86 = scalar_select %p85, %s84, 63
          %s87 = smul.addr %s86, 8
          %s88 = scalar_lea.vmem %s0, %s87
          %s89 = smul.u32 32, %s10
        $region20: #{tpu_custom_call.1} parent=15 // pred_fallthru
          _
      $region16: #{tpu_custom_call.1} parent=5 // pred_fallthru
        _
      %p90 = scmp.le.s32.totalorder 1, %s10
      %p91 = scmp.lt.s32.totalorder %s10, 3
      %p92 = pnand %p90, %p91
      %p93 = pneg %p92
      // Predicated region
      $region21: #{tpu_custom_call.1} parent=5 // pred_check
        _
      $region22: #{tpu_custom_call.1} parent=5 // pred_check_branch
        %95 = sbr.rel (%p92) target = $region24
      $region23: #{tpu_custom_call.1} parent=5 // pred_region
        %s96 = ssub.s32 %s10, 1
        %s97 = smul.u32 32, %s15
        %p98 = scmp.lt.s32.totalorder %s97, 63
        %s99 = scalar_select %p98, %s97, 63
        %s100 = smul.addr %s99, 8
        %s101 = scalar_lea.vmem %s0, %s100
        %p102 = pneg %p36
        %p103 = pneg %p33
        %p104 = pneg %p62
        %p105 = pneg %p59
        %s106 = sand.u32 %s49, 1
        %s107 = scalar_lea.sflag [#allocation3], %s106
        %s108 = sand.u32 %s49, 1
        %s109 = smul.addr %s108, 2
        %s110 = scalar_lea.vmem [#allocation2], %s109
        %s111 = smul.u32 32, %s15
        %p112 = scmp.lt.s32.totalorder %s111, 63
        %s113 = scalar_select %p112, %s111, 63
        %s114 = smul.addr %s113, 8
        %s115 = scalar_lea.vmem %s0, %s114
        %s116 = smul.u32 32, %s15
        %v117 = vld [vmem:[%s115] sm:$0xff]
        %v118 = vld [vmem:[%s115 + $0x8] sm:$0xff]
        %v119 = vld [vmem:[%s115 + $0x10] sm:$0xff]
        %v120 = vld [vmem:[%s115 + $0x18] sm:$0xff]
        %v121 = vld [vmem:[%s115 + $0x20] sm:$0xff]
        %v122 = vld [vmem:[%s115 + $0x28] sm:$0xff]
        %v123 = vld [vmem:[%s115 + $0x30] sm:$0xff]
        %v124 = vld [vmem:[%s115 + $0x38] sm:$0xff]
        %v125 = vld [vmem:[%s115 + $0x40] sm:$0xff]
        %v126 = vld [vmem:[%s115 + $0x48] sm:$0xff]
        %v127 = vld [vmem:[%s115 + $0x50] sm:$0xff]
        %v128 = vld [vmem:[%s115 + $0x58] sm:$0xff]
        %v129 = vld [vmem:[%s115 + $0x60] sm:$0xff]
        %v130 = vld [vmem:[%s115 + $0x68] sm:$0xff]
        %v131 = vld [vmem:[%s115 + $0x70] sm:$0xff]
        %v132 = vld [vmem:[%s115 + $0x78] sm:$0xff]
        %v133 = vld [vmem:[%s115 + $0x80] sm:$0xff]
        %v134 = vld [vmem:[%s115 + $0x88] sm:$0xff]
        %v135 = vld [vmem:[%s115 + $0x90] sm:$0xff]
        %v136 = vld [vmem:[%s115 + $0x98] sm:$0xff]
        %v137 = vld [vmem:[%s115 + $0xa0] sm:$0xff]
        %v138 = vld [vmem:[%s115 + $0xa8] sm:$0xff]
        %v139 = vld [vmem:[%s115 + $0xb0] sm:$0xff]
        %v140 = vld [vmem:[%s115 + $0xb8] sm:$0xff]
        %v141 = vld [vmem:[%s115 + $0xc0] sm:$0xff]
        %v142 = vld [vmem:[%s115 + $0xc8] sm:$0xff]
        %v143 = vld [vmem:[%s115 + $0xd0] sm:$0xff]
        %v144 = vld [vmem:[%s115 + $0xd8] sm:$0xff]
        %v145 = vld [vmem:[%s115 + $0xe0] sm:$0xff]
        %v146 = vld [vmem:[%s115 + $0xe8] sm:$0xff]
        %v147 = vld [vmem:[%s115 + $0xf0] sm:$0xff]
        %v148 = vld [vmem:[%s115 + $0xf8] sm:$0xff]
        %vm149 = vcmask 64512
        %v150 = vsel %vm149, %v117, 0.0
        %v151 = vsel %vm149, %v118, 0.0
        %v152 = vadd.f32 %v150, %v151
        %v153 = vsel %vm149, %v119, 0.0
        %v154 = vadd.f32 %v152, %v153
        %v155 = vsel %vm149, %v120, 0.0
        %v156 = vadd.f32 %v154, %v155
        %v157 = vsel %vm149, %v121, 0.0
        %v158 = vadd.f32 %v156, %v157
        %v159 = vsel %vm149, %v122, 0.0
        %v160 = vadd.f32 %v158, %v159
        %v161 = vsel %vm149, %v123, 0.0
        %v162 = vadd.f32 %v160, %v161
        %v163 = vsel %vm149, %v124, 0.0
        %v164 = vadd.f32 %v162, %v163
        %v165 = vsel %vm149, %v125, 0.0
        %v166 = vadd.f32 %v164, %v165
        %v167 = vsel %vm149, %v126, 0.0
        %v168 = vadd.f32 %v166, %v167
        %v169 = vsel %vm149, %v127, 0.0
        %v170 = vadd.f32 %v168, %v169
        %v171 = vsel %vm149, %v128, 0.0
        %v172 = vadd.f32 %v170, %v171
        %v173 = vsel %vm149, %v129, 0.0
        %v174 = vadd.f32 %v172, %v173
        %v175 = vsel %vm149, %v130, 0.0
        %v176 = vadd.f32 %v174, %v175
        %v177 = vsel %vm149, %v131, 0.0
        %v178 = vadd.f32 %v176, %v177
        %v179 = vsel %vm149, %v132, 0.0
        %v180 = vadd.f32 %v178, %v179
        %v181 = vsel %vm149, %v133, 0.0
        %v182 = vadd.f32 %v180, %v181
        %v183 = vsel %vm149, %v134, 0.0
        %v184 = vadd.f32 %v182, %v183
        %v185 = vsel %vm149, %v135, 0.0
        %v186 = vadd.f32 %v184, %v185
        %v187 = vsel %vm149, %v136, 0.0
        %v188 = vadd.f32 %v186, %v187
        %v189 = vsel %vm149, %v137, 0.0
        %v190 = vadd.f32 %v188, %v189
        %v191 = vsel %vm149, %v138, 0.0
        %v192 = vadd.f32 %v190, %v191
        %v193 = vsel %vm149, %v139, 0.0
        %v194 = vadd.f32 %v192, %v193
        %v195 = vsel %vm149, %v140, 0.0
        %v196 = vadd.f32 %v194, %v195
        %v197 = vsel %vm149, %v141, 0.0
        %v198 = vadd.f32 %v196, %v197
        %v199 = vsel %vm149, %v142, 0.0
        %v200 = vadd.f32 %v198, %v199
        %v201 = vsel %vm149, %v143, 0.0
        %v202 = vadd.f32 %v200, %v201
        %v203 = vsel %vm149, %v144, 0.0
        %v204 = vadd.f32 %v202, %v203
        %v205 = vsel %vm149, %v145, 0.0
        %v206 = vadd.f32 %v204, %v205
        %v207 = vsel %vm149, %v146, 0.0
        %v208 = vadd.f32 %v206, %v207
        %v209 = vsel %vm149, %v147, 0.0
        %v210 = vadd.f32 %v208, %v209
        %v211 = vsel %vm149, %v148, 0.0
        %v212 = vadd.f32 %v210, %v211
        %v213 = vrot.slane %v212, 4
        %v214 = vadd.f32 %v212, %v213
        %v215 = vrot.slane %v214, 2
        %v216 = vadd.f32 %v214, %v215
        %v217 = vrot.slane %v216, 1
        %v218 = vadd.f32 %v216, %v217
        %v219 = vmul.f32 %v117, %v117
        %v220 = vmul.f32 %v118, %v118
        %v221 = vmul.f32 %v119, %v119
        %v222 = vmul.f32 %v120, %v120
        %v223 = vmul.f32 %v121, %v121
        %v224 = vmul.f32 %v122, %v122
        %v225 = vmul.f32 %v123, %v123
        %v226 = vmul.f32 %v124, %v124
        %v227 = vmul.f32 %v125, %v125
        %v228 = vmul.f32 %v126, %v126
        %v229 = vmul.f32 %v127, %v127
        %v230 = vmul.f32 %v128, %v128
        %v231 = vmul.f32 %v129, %v129
        %v232 = vmul.f32 %v130, %v130
        %v233 = vmul.f32 %v131, %v131
        %v234 = vmul.f32 %v132, %v132
        %v235 = vmul.f32 %v133, %v133
        %v236 = vmul.f32 %v134, %v134
        %v237 = vmul.f32 %v135, %v135
        %v238 = vmul.f32 %v136, %v136
        %v239 = vmul.f32 %v137, %v137
        %v240 = vmul.f32 %v138, %v138
        %v241 = vmul.f32 %v139, %v139
        %v242 = vmul.f32 %v140, %v140
        %v243 = vmul.f32 %v141, %v141
        %v244 = vmul.f32 %v142, %v142
        %v245 = vmul.f32 %v143, %v143
        %v246 = vmul.f32 %v144, %v144
        %v247 = vmul.f32 %v145, %v145
        %v248 = vmul.f32 %v146, %v146
        %v249 = vmul.f32 %v147, %v147
        %v250 = vmul.f32 %v148, %v148
        %v251 = vsel %vm149, %v219, 0.0
        %v252 = vsel %vm149, %v220, 0.0
        %v253 = vadd.f32 %v251, %v252
        %v254 = vsel %vm149, %v221, 0.0
        %v255 = vadd.f32 %v253, %v254
        %v256 = vsel %vm149, %v222, 0.0
        %v257 = vadd.f32 %v255, %v256
        %v258 = vsel %vm149, %v223, 0.0
        %v259 = vadd.f32 %v257, %v258
        %v260 = vsel %vm149, %v224, 0.0
        %v261 = vadd.f32 %v259, %v260
        %v262 = vsel %vm149, %v225, 0.0
        %v263 = vadd.f32 %v261, %v262
        %v264 = vsel %vm149, %v226, 0.0
        %v265 = vadd.f32 %v263, %v264
        %v266 = vsel %vm149, %v227, 0.0
        %v267 = vadd.f32 %v265, %v266
        %v268 = vsel %vm149, %v228, 0.0
        %v269 = vadd.f32 %v267, %v268
        %v270 = vsel %vm149, %v229, 0.0
        %v271 = vadd.f32 %v269, %v270
        %v272 = vsel %vm149, %v230, 0.0
        %v273 = vadd.f32 %v271, %v272
        %v274 = vsel %vm149, %v231, 0.0
        %v275 = vadd.f32 %v273, %v274
        %v276 = vsel %vm149, %v232, 0.0
        %v277 = vadd.f32 %v275, %v276
        %v278 = vsel %vm149, %v233, 0.0
        %v279 = vadd.f32 %v277, %v278
        %v280 = vsel %vm149, %v234, 0.0
        %v281 = vadd.f32 %v279, %v280
        %v282 = vsel %vm149, %v235, 0.0
        %v283 = vadd.f32 %v281, %v282
        %v284 = vsel %vm149, %v236, 0.0
        %v285 = vadd.f32 %v283, %v284
        %v286 = vsel %vm149, %v237, 0.0
        %v287 = vadd.f32 %v285, %v286
        %v288 = vsel %vm149, %v238, 0.0
        %v289 = vadd.f32 %v287, %v288
        %v290 = vsel %vm149, %v239, 0.0
        %v291 = vadd.f32 %v289, %v290
        %v292 = vsel %vm149, %v240, 0.0
        %v293 = vadd.f32 %v291, %v292
        %v294 = vsel %vm149, %v241, 0.0
        %v295 = vadd.f32 %v293, %v294
        %v296 = vsel %vm149, %v242, 0.0
        %v297 = vadd.f32 %v295, %v296
        %v298 = vsel %vm149, %v243, 0.0
        %v299 = vadd.f32 %v297, %v298
        %v300 = vsel %vm149, %v244, 0.0
        %v301 = vadd.f32 %v299, %v300
        %v302 = vsel %vm149, %v245, 0.0
        %v303 = vadd.f32 %v301, %v302
        %v304 = vsel %vm149, %v246, 0.0
        %v305 = vadd.f32 %v303, %v304
        %v306 = vsel %vm149, %v247, 0.0
        %v307 = vadd.f32 %v305, %v306
        %v308 = vsel %vm149, %v248, 0.0
        %v309 = vadd.f32 %v307, %v308
        %v310 = vsel %vm149, %v249, 0.0
        %v311 = vadd.f32 %v309, %v310
        %v312 = vsel %vm149, %v250, 0.0
        %v313 = vadd.f32 %v311, %v312
        %v314 = vrot.slane %v313, 4
        %v315 = vadd.f32 %v313, %v314
        %v316 = vrot.slane %v315, 2
        %v317 = vadd.f32 %v315, %v316
        %v318 = vrot.slane %v317, 1
        %v319 = vadd.f32 %v317, %v318
        %vm320 = vcmask 1040384
        %v321 = vsel %vm320, %v218, %v319
        %vm322 = vcmask 58368
        %323 = vst.msk [vmem:[%s110] sm:$0x3] %vm322, %v321
        %s324 = sand.u32 %s49, 1
        %s325 = scalar_lea.sflag [#allocation3], %s324
        %s326 = sand.u32 %s49, 1
        %s327 = smul.addr %s326, 2
        %s328 = scalar_lea.vmem [#allocation2], %s327
        // Predicated region
        $region25: #{tpu_custom_call.1} parent=23 // pred_check
          %p329 = pneg %p59
        $region26: #{tpu_custom_call.1} parent=23 // pred_check_branch
          %331 = sbr.rel (%p329) target = $region28
        $region27: #{tpu_custom_call.1} parent=23 // pred_region
          %s333 = ssub.s32 32, 32
          %334 = vsyncadd %s325, %s333
          %s335 = smul.addr %s15, 32
          %s336 = scalar_lea.hbm %s1, %s335
          %s338 = sshll.u32 %s328, 4
          %s339 = int_to_ptr.vmem [resolvable:$true] %s338
          %341 = dma.vmem_to_hbm [thread:$0]  %s339, 32, %s336, %s325
        $region28: #{tpu_custom_call.1} parent=23 // pred_fallthru
          _
      $region24: #{tpu_custom_call.1} parent=5 // pred_fallthru
        _
      %p342 = scmp.le.s32.totalorder 2, %s10
      // Predicated region
      $region29: #{tpu_custom_call.1} parent=5 // pred_check
        %p343 = pneg %p342
      $region30: #{tpu_custom_call.1} parent=5 // pred_check_branch
        %345 = sbr.rel (%p343) target = $region32
      $region31: #{tpu_custom_call.1} parent=5 // pred_region
        %s346 = ssub.s32 %s10, 2
        // Predicated region
        $region33: #{tpu_custom_call.1} parent=31 // pred_check
          %p347 = pneg %p65
        $region34: #{tpu_custom_call.1} parent=31 // pred_check_branch
          %349 = sbr.rel (%p347) target = $region36
        $region35: #{tpu_custom_call.1} parent=31 // pred_region
          %s350 = sand.u32 %s50, 1
          %s351 = scalar_lea.sflag [#allocation3], %s350
          %s352 = sand.u32 %s50, 1
          %s353 = smul.addr %s352, 2
          %s354 = scalar_lea.vmem [#allocation2], %s353
          %355 = dma.done %s351, 32
        $region36: #{tpu_custom_call.1} parent=31 // pred_fallthru
          _
      $region32: #{tpu_custom_call.1} parent=5 // pred_fallthru
        _
    $region6: #{tpu_custom_call.1} parent=1 // loop_footer
      %s14 = sadd.s32 1, %s10
    $region7: #{tpu_custom_call.1} parent=1 // loop_footer_branch
      %9 = sbr.rel target = $region3
    $region8: #{tpu_custom_call.1} parent=1 // loop_exit
      _
    %356 = vsyncpa [#allocation3], 1
    %s357 = scalar_lea.sflag [#allocation3], 1
    %358 = vsyncpa %s357, 1

</llo_original>
